<compile_context>
chip_gen: v7x
topology: tpu7x:2x2x1
jax: 0.10.0
libtpu: 0.0.40
codegen_flags: <defaults>
</compile_context>

<pallas_src>
import functools

import jax
import jax.numpy as jnp
from jax.experimental import pallas as pl
from jax.experimental.pallas import tpu as pltpu


# ---------------------------------------------------------------------------
# Kernel
# ---------------------------------------------------------------------------
def _lstm_step_kernel(lv_ref, hprev_ref, w_ref, b_ref, out_ref):
    C = lv_ref.shape[-1]
    # Single fused MXU matmul: [tile_N, 2C] (bf16) @ [2C, 3C] (bf16) -> f32 gates.
    x = jnp.concatenate([lv_ref[...], hprev_ref[...]], axis=-1).astype(jnp.bfloat16)
    gates = jnp.dot(x, w_ref[...], preferred_element_type=jnp.float32) + b_ref[...]

    # Gate order after dropping the (dead) forget gate: i, g, o.
    i = jax.nn.sigmoid(gates[:, 0:C])
    g = jnp.tanh(gates[:, C:2 * C])
    o = jax.nn.sigmoid(gates[:, 2 * C:3 * C])

    # Cell state is always zero in this module -> c_new = i * g.
    out_ref[...] = (o * jnp.tanh(i * g)).astype(out_ref.dtype)


# ---------------------------------------------------------------------------
# Wrapper (jitted; params already fused/transposed in __init__)
# ---------------------------------------------------------------------------
@functools.partial(jax.jit, static_argnames=("tile_n",))
def lstm_module_step(lv, h_prev, w_fused, b_fused, *, tile_n=128):
    """One stateful LSTMModule step (non-first-call branch) as a Pallas kernel."""
    N, C = lv.shape
    tn = min(tile_n, N)
    grid = (pl.cdiv(N, tn),)

    row_spec = pl.BlockSpec((tn, C), lambda i: (i, 0))

    return pl.pallas_call(
        _lstm_step_kernel,
        out_shape=jax.ShapeDtypeStruct((N, C), lv.dtype),
        grid_spec=pltpu.PrefetchScalarGridSpec(
            num_scalar_prefetch=0,
            grid=grid,
            in_specs=[
                row_spec,                                          # lv tile
                row_spec,                                          # h_prev tile
                pl.BlockSpec((2 * C, 3 * C), lambda i: (0, 0)),    # fused weight, VMEM-resident
                pl.BlockSpec((1, 3 * C), lambda i: (0, 0)),        # fused bias,   VMEM-resident
            ],
            out_specs=row_spec,
        ),
        # h_prev is overwritten by the new state every step -> reuse its buffer.
        input_output_aliases={1: 0},
        compiler_params=pltpu.CompilerParams(
            dimension_semantics=("parallel",),          # split row tiles across TCs on v7x
            vmem_limit_bytes=32 * 1024 * 1024,
        ),
    )(lv, h_prev, w_fused, b_fused)


# ---------------------------------------------------------------------------
# Host-side parameter fusion (done once)
# ---------------------------------------------------------------------------
def _fuse_params(p):
    """Fold hidden_linear into the LSTMCell gate matmul and drop the dead forget gate.

      gates = lv @ W_ih^T + h @ W_hh^T + (b_ih + b_hh),   h = hprev @ W_hl^T + b_hl
            = [lv, hprev] @ [[W_ih^T], [W_hl^T @ W_hh^T]] + (b_hl @ W_hh^T + b_ih + b_hh)
    """
    C = p["w_hl"].shape[0]
    keep = jnp.concatenate([jnp.arange(0, C), jnp.arange(2 * C, 4 * C)])  # i, g, o rows
    w_ih_k = p["w_ih"][keep]                                   # [3C, C]
    w_hh_k = p["w_hh"][keep]                                   # [3C, C]
    b_k = (p["b_ih"] + p["b_hh"])[keep]                        # [3C]

    w_top = w_ih_k.T                                           # [C, 3C]
    w_bot = p["w_hl"].T @ w_hh_k.T                             # [C, 3C]
    w_fused = jnp.concatenate([w_top, w_bot], axis=0).astype(jnp.bfloat16)   # [2C, 3C]
    b_fused = (p["b_hl"] @ w_hh_k.T + b_k).reshape(1, 3 * C).astype(jnp.float32)
    return w_fused, b_fused


# ---------------------------------------------------------------------------
# Module-level stateful port
# ---------------------------------------------------------------------------
class LatticeStub:
    """Minimal stand-in for the `ls` lattice object (only .set_values is used)."""
    # TODO(synk): real lattice structure semantics (geometry/indexing) are not translatable here.
    def __init__(self):
        self.values = None

    def set_values(self, v):
        self.values = v


class LSTMModuleJAX:
    """Stateful JAX/Pallas port of LSTMModule."""

    def __init__(self, nr_output_channels, key):
        C = nr_output_channels
        k = jax.random.split(key, 6)
        bound = 1.0 / (C ** 0.5)
        u = lambda kk, shape: jax.random.uniform(kk, shape, jnp.float32, -bound, bound)
        self.params = {
            # LSTMCell params: weight_ih [4C, C], weight_hh [4C, C], biases [4C]
            "w_ih": u(k[0], (4 * C, C)),
            "w_hh": u(k[1], (4 * C, C)),
            "b_ih": u(k[2], (4 * C,)),
            "b_hh": u(k[3], (4 * C,)),
            # hidden_linear: weight [C, C], bias [C]
            "w_hl": u(k[4], (C, C)),
            "b_hl": u(k[5], (C,)),
        }
        # Pre-transpose / pre-fuse once (not per step).
        self.w_fused, self.b_fused = _fuse_params(self.params)
        self.h_lv = None

    def reset_sequence(self):
        self.h_lv = None

    def __call__(self, lv, ls):
        if self.h_lv is None:
            self.h_lv = lv            # .clone() unnecessary: JAX arrays are immutable
            return lv, ls
        lv_new = lstm_module_step(lv, self.h_lv, self.w_fused, self.b_fused)
        self.h_lv = lv_new
        ls.set_values(lv_new)
        return lv_new, ls


# ---------------------------------------------------------------------------
# Pure-JAX references
# ---------------------------------------------------------------------------
def _reference_step_exact(lv, h_prev, p):
    """Exact f32, unfused reference (mirrors the PyTorch module)."""
    C = lv.shape[-1]
    h = h_prev @ p["w_hl"].T + p["b_hl"]
    gates = lv @ p["w_ih"].T + p["b_ih"] + h @ p["w_hh"].T + p["b_hh"]
    i = jax.nn.sigmoid(gates[:, 0:C])
    g = jnp.tanh(gates[:, 2 * C:3 * C])
    o = jax.nn.sigmoid(gates[:, 3 * C:4 * C])
    return o * jnp.tanh(i * g)


def _reference_step_fused(lv, h_prev, w_fused, b_fused):
    """Same fused bf16 math as the kernel, in plain JAX (tight-tolerance check)."""
    C = lv.shape[-1]
    x = jnp.concatenate([lv, h_prev], axis=-1).astype(jnp.bfloat16)
    gates = jnp.dot(x, w_fused, preferred_element_type=jnp.float32) + b_fused
    i = jax.nn.sigmoid(gates[:, 0:C])
    g = jnp.tanh(gates[:, C:2 * C])
    o = jax.nn.sigmoid(gates[:, 2 * C:3 * C])
    return o * jnp.tanh(i * g)


# ---------------------------------------------------------------------------
if __name__ == "__main__":
    # Lane/sublane-friendly small shapes: 256 lattice rows, 128 channels
    # (C multiple of 128 -> lane-dense gate slabs; N > tile_n exercises the row grid).
    N, C = 256, 128
    key = jax.random.PRNGKey(0)
    k_mod, k_lv1, k_lv2 = jax.random.split(key, 3)

    module = LSTMModuleJAX(C, k_mod)
    ls = LatticeStub()

    lv1 = jax.random.normal(k_lv1, (N, C), jnp.float32)
    lv2 = jax.random.normal(k_lv2, (N, C), jnp.float32)

    # First call: just stores state, passes lv through.
    out1, ls = module(lv1, ls)

    # Second call: hits the Pallas kernel (fused hidden_linear + LSTMCell, zero cell state).
    out2, ls = module(lv2, ls)
    out2 = jax.block_until_ready(out2)

    ref_fused = _reference_step_fused(lv2, lv1, module.w_fused, module.b_fused)
    ref_exact = _reference_step_exact(lv2, lv1, module.params)

    assert out2.shape == (N, C)
    assert jnp.allclose(out2, ref_fused, atol=1e-3, rtol=1e-3), \
        "Pallas kernel mismatch vs fused bf16 reference"
    assert jnp.allclose(out2, ref_exact, atol=3e-2, rtol=3e-2), \
        "Pallas kernel mismatch vs exact f32 reference"

    print("KERNEL_OK")
</pallas_src>

<mosaic_0001>
module attributes {stable_mosaic.version = 11 : i64} {
  func.func @_lstm_step_kernel(%arg0: i32, %arg1: memref<128x128xf32, #tpu.memory_space<vmem>>, %arg2: memref<128x128xf32, #tpu.memory_space<vmem>>, %arg3: memref<256x384xbf16, #tpu.memory_space<vmem>>, %arg4: memref<1x384xf32, #tpu.memory_space<vmem>>, %arg5: memref<128x128xf32, #tpu.memory_space<vmem>>) attributes {dimension_semantics = [#tpu.dimension_semantics<parallel>], iteration_bounds = array<i64: 2>, scalar_prefetch = 0 : i64, scratch_operands = 0 : i64, tpu.core_type = #tpu.core_type<tc>, window_params = [{transform_indices = @transform_0, window_bounds = array<i64: 128, 128>}, {transform_indices = @transform_1, window_bounds = array<i64: 128, 128>}, {pipeline_mode = #tpu.pipeline_mode<synchronous>, transform_indices = @transform_2, window_bounds = array<i64: 256, 384>}, {pipeline_mode = #tpu.pipeline_mode<synchronous>, transform_indices = @transform_3, window_bounds = array<i64: 1, 384>}, {transform_indices = @transform_4, window_bounds = array<i64: 128, 128>}]} {
    %c0 = arith.constant 0 : index
    %c0_0 = arith.constant 0 : index
    %0 = vector.load %arg1[%c0, %c0_0] : memref<128x128xf32, #tpu.memory_space<vmem>>, vector<128x128xf32>
    %c0_1 = arith.constant 0 : index
    %c0_2 = arith.constant 0 : index
    %1 = vector.load %arg2[%c0_1, %c0_2] : memref<128x128xf32, #tpu.memory_space<vmem>>, vector<128x128xf32>
    %2 = tpu.concatenate %0, %1 in 1 : vector<128x128xf32>, vector<128x128xf32> -> vector<128x256xf32>
    %3 = arith.truncf %2 : vector<128x256xf32> to vector<128x256xbf16>
    %c0_3 = arith.constant 0 : index
    %c0_4 = arith.constant 0 : index
    %4 = vector.load %arg3[%c0_3, %c0_4] : memref<256x384xbf16, #tpu.memory_space<vmem>>, vector<256x384xbf16>
    %cst = arith.constant dense<0.000000e+00> : vector<128x384xf32>
    %5 = tpu.matmul %3, %4, %cst {dimension_numbers = #tpu.dot_dimension_numbers<[1], [0], [0], [1], [0, 0, 1, 1], [], []>} : vector<128x256xbf16>, vector<256x384xbf16>, vector<128x384xf32> -> vector<128x384xf32>
    %c0_5 = arith.constant 0 : index
    %c0_6 = arith.constant 0 : index
    %6 = vector.load %arg4[%c0_5, %c0_6] : memref<1x384xf32, #tpu.memory_space<vmem>>, vector<1x384xf32>
    %7 = vector.broadcast %6 : vector<1x384xf32> to vector<128x384xf32>
    %8 = arith.addf %5, %7 : vector<128x384xf32>
    %9 = vector.extract_strided_slice %8 {offsets = [0, 0], sizes = [128, 128], strides = [1, 1]} : vector<128x384xf32> to vector<128x128xf32>
    %10 = arith.negf %9 : vector<128x128xf32>
    %11 = math.exp %10 : vector<128x128xf32>
    %cst_7 = arith.constant 1.000000e+00 : f32
    %12 = vector.broadcast %cst_7 : f32 to vector<128x128xf32>
    %13 = arith.addf %12, %11 : vector<128x128xf32>
    %14 = arith.divf %12, %13 : vector<128x128xf32>
    %15 = vector.extract_strided_slice %8 {offsets = [0, 128], sizes = [128, 128], strides = [1, 1]} : vector<128x384xf32> to vector<128x128xf32>
    %16 = math.tanh %15 : vector<128x128xf32>
    %17 = vector.extract_strided_slice %8 {offsets = [0, 256], sizes = [128, 128], strides = [1, 1]} : vector<128x384xf32> to vector<128x128xf32>
    %18 = arith.negf %17 : vector<128x128xf32>
    %19 = math.exp %18 : vector<128x128xf32>
    %cst_8 = arith.constant 1.000000e+00 : f32
    %20 = vector.broadcast %cst_8 : f32 to vector<128x128xf32>
    %21 = arith.addf %20, %19 : vector<128x128xf32>
    %22 = arith.divf %20, %21 : vector<128x128xf32>
    %23 = arith.mulf %14, %16 : vector<128x128xf32>
    %24 = math.tanh %23 : vector<128x128xf32>
    %25 = arith.mulf %22, %24 : vector<128x128xf32>
    %c0_9 = arith.constant 0 : index
    %c0_10 = arith.constant 0 : index
    %26 = vector.load %arg5[%c0_9, %c0_10] : memref<128x128xf32, #tpu.memory_space<vmem>>, vector<128x128xf32>
    tpu.vector_store %arg5[%c0_9, %c0_10], %25 {strides = array<i32>} : memref<128x128xf32, #tpu.memory_space<vmem>>, vector<128x128xf32>,
    return
  }
  func.func @transform_0(%arg0: i32) -> (i32, i32) {
    %c0_i32 = arith.constant 0 : i32
    %c0_i32_0 = arith.constant 0 : i32
    return %arg0, %c0_i32 : i32, i32
  }
  func.func @transform_1(%arg0: i32) -> (i32, i32) {
    %c0_i32 = arith.constant 0 : i32
    %c0_i32_0 = arith.constant 0 : i32
    return %arg0, %c0_i32 : i32, i32
  }
  func.func @transform_2(%arg0: i32) -> (i32, i32) {
    %c0_i32 = arith.constant 0 : i32
    %c0_i32_0 = arith.constant 0 : i32
    %c0_i32_1 = arith.constant 0 : i32
    return %c0_i32, %c0_i32_0 : i32, i32
  }
  func.func @transform_3(%arg0: i32) -> (i32, i32) {
    %c0_i32 = arith.constant 0 : i32
    %c0_i32_0 = arith.constant 0 : i32
    %c0_i32_1 = arith.constant 0 : i32
    return %c0_i32, %c0_i32_0 : i32, i32
  }
  func.func @transform_4(%arg0: i32) -> (i32, i32) {
    %c0_i32 = arith.constant 0 : i32
    %c0_i32_0 = arith.constant 0 : i32
    return %arg0, %c0_i32 : i32, i32
  }
}

</mosaic_0001>

<llo_original>
// kernel: lstm_module_step.1
$region0: #{lstm_module_step.1}
  #allocation0 [shape = 'u32[]', space=smem, size = 0x4, offset = 0x4, fixed_abs, tag = 'smem constant byte address 0x4 - core index']
  #allocation1 [shape = 'u32[144,128]{1,0:T(1,128)}', space=vmem, size = 0x12000, scoped, tag = 'internal scratch']
  %s0 = inlined_call_operand.hbm [shape: f32[256,128], index: 0, kind: input, shape index: {}]
  %s1 = inlined_call_operand.hbm [shape: f32[256,128], index: 1, kind: input, shape index: {}, may-alias: {1,4}]
  %s2 = inlined_call_operand.vmem [shape: bf16[256,384], index: 2, kind: input, shape index: {}]
  %s3 = inlined_call_operand.vmem [shape: f32[1,384], index: 3, kind: input, shape index: {}]
  %s4 = inlined_call_operand.hbm [shape: f32[256,128], index: 4, kind: output, shape index: {}, may-alias: {1,4}]
  %s5 = sld [smem:[#allocation0]]
  $region57: #{lstm_module_step.1} parent=0
    _
  %s7 = ssub.s32 1, %s5
  %s8 = scalar_select 0, %s7, %s5
  $region1: #{lstm_module_step.1} parent=0
    #allocation2 [shape = 'u8[131072]{0}', space=vmem, size = 0x20000, scoped, tag = 'input window, operand 0']
    #allocation3 [shape = 's32[2]{0}', space=sflag, size = 0x8, scoped, tag = 'scoped memory for lstm_module_step.1']
    #allocation4 [shape = 's32[2]{0}', space=sflag, size = 0x8, scoped, tag = 'scoped memory for lstm_module_step.1']
    #allocation5 [shape = 'u8[131072]{0}', space=vmem, size = 0x20000, scoped, tag = 'input window, operand 1']
    #allocation6 [shape = 's32[2]{0}', space=sflag, size = 0x8, scoped, tag = 'scoped memory for lstm_module_step.1']
    #allocation7 [shape = 'u8[131072]{0}', space=vmem, size = 0x20000, scoped, tag = 'output window, operand 0']
    %9 = vsyncpa [#allocation3], 0
    %s10 = scalar_lea.sflag [#allocation3], 1
    %11 = vsyncpa %s10, 0
    %12 = vsyncpa [#allocation6], 0
    %s13 = scalar_lea.sflag [#allocation6], 1
    %14 = vsyncpa %s13, 0
    %15 = vsyncpa [#allocation4], 0
    %s16 = scalar_lea.sflag [#allocation4], 1
    %17 = vsyncpa %s16, 0
    loop: start=0, step=1, limit=4
    $region2: #{lstm_module_step.1} parent=1 // loop_pre_header
      _
    $region3: #{lstm_module_step.1} parent=1 // loop_header
      %s19 = sphi 0, %s23
      %p20 = scmp.ge.s32.totalorder %s19, 4
      %s29 = sphi 0, %s31
      %s32 = sphi 0, %s29
      %s33 = sphi 0, %s32
      %s49 = sphi 0, %s33
      %s55 = sphi 0, %s57
      %s58 = sphi 0, %s55
      %s59 = sphi 0, %s58
      %s75 = sphi 0, %s59
      %s79 = sphi 0, %s79
      %s81 = sphi 0, %s79
      %s82 = sphi 0, %s81
      %s96 = sphi 0, %s82
      %s100 = sphi 0, %s100
      %s102 = sphi 0, %s100
      %s103 = sphi 0, %s102
      %s117 = sphi 0, %s103
      %s123 = sphi 0, %s125
      %s126 = sphi 0, %s123
      %s127 = sphi 0, %s126
      %s143 = sphi 0, %s127
    $region4: #{lstm_module_step.1} parent=1 // loop_header_branch
      %22 = sbr.rel (%p20) target = $region8
    $region5: #{lstm_module_step.1} parent=1 // loop_body
      %s24 = ssub.s32 %s19, 1
      %s25 = ssub.s32 %s19, 2
      %s26 = sadd.s32 %s19, 1
      %s27 = ssub.s32 %s19, %s26
      %p28 = scmp.eq.s32.totalorder %s27, 0
      %s30 = sadd.s32 %s29, 1
      %s31 = scalar_select %p28, %s29, %s30
      %p34 = pneg %p28
      %p35 = scmp.eq.s32.totalorder %s19, 1
      %p36 = por %p34, %p35
      %p37 = scmp.ne.s32.totalorder %s29, %s32
      %p38 = scmp.eq.s32.totalorder %s19, 0
      %p39 = por %p37, %p38
      %p40 = scmp.ne.s32.totalorder %s29, %s32
      %p41 = scmp.eq.s32.totalorder %s24, 1
      %p42 = por %p40, %p41
      %p43 = scmp.ne.s32.totalorder %s32, %s33
      %p44 = scmp.eq.s32.totalorder %s24, 0
      %p45 = por %p43, %p44
      %p46 = scmp.ne.s32.totalorder %s32, %s33
      %p47 = scmp.eq.s32.totalorder %s25, 1
      %p48 = por %p46, %p47
      %p50 = scmp.ne.s32.totalorder %s33, %s49
      %p51 = scmp.eq.s32.totalorder %s25, 0
      %p52 = por %p50, %p51
      %s53 = ssub.s32 %s19, %s26
      %p54 = scmp.eq.s32.totalorder %s53, 0
      %s56 = sadd.s32 %s55, 1
      %s57 = scalar_select %p54, %s55, %s56
      %p60 = pneg %p54
      %p61 = scmp.eq.s32.totalorder %s19, 1
      %p62 = por %p60, %p61
      %p63 = scmp.ne.s32.totalorder %s55, %s58
      %p64 = scmp.eq.s32.totalorder %s19, 0
      %p65 = por %p63, %p64
      %p66 = scmp.ne.s32.totalorder %s55, %s58
      %p67 = scmp.eq.s32.totalorder %s24, 1
      %p68 = por %p66, %p67
      %p69 = scmp.ne.s32.totalorder %s58, %s59
      %p70 = scmp.eq.s32.totalorder %s24, 0
      %p71 = por %p69, %p70
      %p72 = scmp.ne.s32.totalorder %s58, %s59
      %p73 = scmp.eq.s32.totalorder %s25, 1
      %p74 = por %p72, %p73
      %p76 = scmp.ne.s32.totalorder %s59, %s75
      %p77 = scmp.eq.s32.totalorder %s25, 0
      %p78 = por %p76, %p77
      %s80 = sadd.s32 %s79, 1
      %p83 = scmp.eq.s32.totalorder %s19, 1
      %p84 = scmp.ne.s32.totalorder %s79, %s81
      %p85 = scmp.eq.s32.totalorder %s19, 0
      %p86 = por %p84, %p85
      %p87 = scmp.ne.s32.totalorder %s79, %s81
      %p88 = scmp.eq.s32.totalorder %s24, 1
      %p89 = por %p87, %p88
      %p90 = scmp.ne.s32.totalorder %s81, %s82
      %p91 = scmp.eq.s32.totalorder %s24, 0
      %p92 = por %p90, %p91
      %p93 = scmp.ne.s32.totalorder %s81, %s82
      %p94 = scmp.eq.s32.totalorder %s25, 1
      %p95 = por %p93, %p94
      %p97 = scmp.ne.s32.totalorder %s82, %s96
      %p98 = scmp.eq.s32.totalorder %s25, 0
      %p99 = por %p97, %p98
      %s101 = sadd.s32 %s100, 1
      %p104 = scmp.eq.s32.totalorder %s19, 1
      %p105 = scmp.ne.s32.totalorder %s100, %s102
      %p106 = scmp.eq.s32.totalorder %s19, 0
      %p107 = por %p105, %p106
      %p108 = scmp.ne.s32.totalorder %s100, %s102
      %p109 = scmp.eq.s32.totalorder %s24, 1
      %p110 = por %p108, %p109
      %p111 = scmp.ne.s32.totalorder %s102, %s103
      %p112 = scmp.eq.s32.totalorder %s24, 0
      %p113 = por %p111, %p112
      %p114 = scmp.ne.s32.totalorder %s102, %s103
      %p115 = scmp.eq.s32.totalorder %s25, 1
      %p116 = por %p114, %p115
      %p118 = scmp.ne.s32.totalorder %s103, %s117
      %p119 = scmp.eq.s32.totalorder %s25, 0
      %p120 = por %p118, %p119
      %s121 = ssub.s32 %s19, %s26
      %p122 = scmp.eq.s32.totalorder %s121, 0
      %s124 = sadd.s32 %s123, 1
      %s125 = scalar_select %p122, %s123, %s124
      %p128 = pneg %p122
      %p129 = scmp.eq.s32.totalorder %s19, 1
      %p130 = por %p128, %p129
      %p131 = scmp.ne.s32.totalorder %s123, %s126
      %p132 = scmp.eq.s32.totalorder %s19, 0
      %p133 = por %p131, %p132
      %p134 = scmp.ne.s32.totalorder %s123, %s126
      %p135 = scmp.eq.s32.totalorder %s24, 1
      %p136 = por %p134, %p135
      %p137 = scmp.ne.s32.totalorder %s126, %s127
      %p138 = scmp.eq.s32.totalorder %s24, 0
      %p139 = por %p137, %p138
      %p140 = scmp.ne.s32.totalorder %s126, %s127
      %p141 = scmp.eq.s32.totalorder %s25, 1
      %p142 = por %p140, %p141
      %p144 = scmp.ne.s32.totalorder %s127, %s143
      %p145 = scmp.eq.s32.totalorder %s25, 0
      %p146 = por %p144, %p145
      %p147 = scmp.le.s32.totalorder 1, %s19
      %p148 = scmp.lt.s32.totalorder %s19, 3
      %p149 = pnand %p147, %p148
      %p150 = pneg %p149
      // Predicated region
      $region9: #{lstm_module_step.1} parent=5 // pred_check
        _
      $region10: #{lstm_module_step.1} parent=5 // pred_check_branch
        %152 = sbr.rel (%p149) target = $region12
      $region11: #{lstm_module_step.1} parent=5 // pred_region
        %s153 = ssub.s32 %s19, 1
        // Predicated region
        $region13: #{lstm_module_step.1} parent=11 // pred_check
          %p154 = pneg %p92
        $region14: #{lstm_module_step.1} parent=11 // pred_check_branch
          %156 = sbr.rel (%p154) target = $region16
        $region15: #{lstm_module_step.1} parent=11 // pred_region
          _
        $region16: #{lstm_module_step.1} parent=11 // pred_fallthru
          _
        // Predicated region
        $region17: #{lstm_module_step.1} parent=11 // pred_check
          %p157 = pneg %p113
        $region18: #{lstm_module_step.1} parent=11 // pred_check_branch
          %159 = sbr.rel (%p157) target = $region20
        $region19: #{lstm_module_step.1} parent=11 // pred_region
          _
        $region20: #{lstm_module_step.1} parent=11 // pred_fallthru
          _
      $region12: #{lstm_module_step.1} parent=5 // pred_fallthru
        _
      %p160 = scmp.lt.s32.totalorder %s19, 2
      // Predicated region
      $region21: #{lstm_module_step.1} parent=5 // pred_check
        %p161 = pneg %p160
      $region22: #{lstm_module_step.1} parent=5 // pred_check_branch
        %163 = sbr.rel (%p161) target = $region24
      $region23: #{lstm_module_step.1} parent=5 // pred_region
        // Predicated region
        $region25: #{lstm_module_step.1} parent=23 // pred_check
          %p164 = pneg %p39
        $region26: #{lstm_module_step.1} parent=23 // pred_check_branch
          %166 = sbr.rel (%p164) target = $region28
        $region27: #{lstm_module_step.1} parent=23 // pred_region
          %s167 = sand.u32 %s29, 1
          %s168 = scalar_lea.sflag [#allocation3], %s167
          %s169 = sand.u32 %s29, 1
          %s170 = smul.addr %s169, 128
          %s171 = scalar_lea.vmem [#allocation2], %s170
          %s172 = smul.u32 16, %s19
          %s174 = ssub.s32 2048, 2048
          %175 = vsyncadd %s168, %s174
          %s176 = smul.addr %s172, 128
          %s177 = scalar_lea.hbm %s0, %s176
          %s178 = sshll.u32 %s171, 4
          %s179 = int_to_ptr.vmem [resolvable:$true] %s178
          %184 = dma.hbm_to_vmem [thread:$0]  %s177, 2048, %s179, %s168, 128, 128, 8
        $region28: #{lstm_module_step.1} parent=23 // pred_fallthru
          _
        // Predicated region
        $region29: #{lstm_module_step.1} parent=23 // pred_check
          %p185 = pneg %p65
        $region30: #{lstm_module_step.1} parent=23 // pred_check_branch
          %187 = sbr.rel (%p185) target = $region32
        $region31: #{lstm_module_step.1} parent=23 // pred_region
          %s188 = sand.u32 %s55, 1
          %s189 = scalar_lea.sflag [#allocation6], %s188
          %s190 = sand.u32 %s55, 1
          %s191 = smul.addr %s190, 128
          %s192 = scalar_lea.vmem [#allocation5], %s191
          %s193 = smul.u32 16, %s19
          %s195 = ssub.s32 2048, 2048
          %196 = vsyncadd %s189, %s195
          %s197 = smul.addr %s193, 128
          %s198 = scalar_lea.hbm %s1, %s197
          %s199 = sshll.u32 %s192, 4
          %s200 = int_to_ptr.vmem [resolvable:$true] %s199
          %205 = dma.hbm_to_vmem [thread:$0]  %s198, 2048, %s200, %s189, 128, 128, 8
        $region32: #{lstm_module_step.1} parent=23 // pred_fallthru
          _
      $region24: #{lstm_module_step.1} parent=5 // pred_fallthru
        _
      %p206 = scmp.le.s32.totalorder 1, %s19
      %p207 = scmp.lt.s32.totalorder %s19, 3
      %p208 = pnand %p206, %p207
      %p209 = pneg %p208
      // Predicated region
      $region33: #{lstm_module_step.1} parent=5 // pred_check
        _
      $region34: #{lstm_module_step.1} parent=5 // pred_check_branch
        %211 = sbr.rel (%p208) target = $region36
      $region35: #{lstm_module_step.1} parent=5 // pred_region
        %s212 = ssub.s32 %s19, 1
        %s213 = sand.u32 %s32, 1
        %s214 = scalar_lea.sflag [#allocation3], %s213
        %s215 = sand.u32 %s32, 1
        %s216 = smul.addr %s215, 128
        %s217 = scalar_lea.vmem [#allocation2], %s216
        // Predicated region
        $region37: #{lstm_module_step.1} parent=35 // pred_check
          %p218 = pneg %p45
        $region38: #{lstm_module_step.1} parent=35 // pred_check_branch
          %220 = sbr.rel (%p218) target = $region40
        $region39: #{lstm_module_step.1} parent=35 // pred_region
          %221 = dma.done %s214, 2048
        $region40: #{lstm_module_step.1} parent=35 // pred_fallthru
          _
        %s222 = sand.u32 %s58, 1
        %s223 = scalar_lea.sflag [#allocation6], %s222
        %s224 = sand.u32 %s58, 1
        %s225 = smul.addr %s224, 128
        %s226 = scalar_lea.vmem [#allocation5], %s225
        // Predicated region
        $region41: #{lstm_module_step.1} parent=35 // pred_check
          %p227 = pneg %p71
        $region42: #{lstm_module_step.1} parent=35 // pred_check_branch
          %229 = sbr.rel (%p227) target = $region44
        $region43: #{lstm_module_step.1} parent=35 // pred_region
          %230 = dma.done %s223, 2048
        $region44: #{lstm_module_step.1} parent=35 // pred_fallthru
          _
        %s231 = sand.u32 %s32, 1
        %s232 = scalar_lea.sflag [#allocation3], %s231
        %s233 = sand.u32 %s32, 1
        %s234 = smul.addr %s233, 128
        %s235 = scalar_lea.vmem [#allocation2], %s234
        %p236 = pneg %p45
        %p237 = pneg %p42
        %s238 = sand.u32 %s58, 1
        %s239 = scalar_lea.sflag [#allocation6], %s238
        %s240 = sand.u32 %s58, 1
        %s241 = smul.addr %s240, 128
        %s242 = scalar_lea.vmem [#allocation5], %s241
        %p243 = pneg %p71
        %p244 = pneg %p68
        %p245 = pneg %p92
        %p246 = pneg %p89
        %p247 = pneg %p113
        %p248 = pneg %p110
        %p249 = pneg %p139
        %p250 = pneg %p136
        %s251 = sand.u32 %s126, 1
        %s252 = scalar_lea.sflag [#allocation4], %s251
        %s253 = sand.u32 %s126, 1
        %s254 = smul.addr %s253, 128
        %s255 = scalar_lea.vmem [#allocation7], %s254
        %s256 = smul.u32 16, %s24
        %s257 = smul.u32 16, %s24
        %s258 = smul.u32 16, %s24
        %v260 = vld [vmem:[%s217] sm:$0xff]
        %v261 = vld [vmem:[%s217 + $0x8] sm:$0xff]
        %v262 = vld [vmem:[%s217 + $0x10] sm:$0xff]
        %v263 = vld [vmem:[%s217 + $0x18] sm:$0xff]
        %v264 = vld [vmem:[%s217 + $0x20] sm:$0xff]
        %v265 = vld [vmem:[%s217 + $0x28] sm:$0xff]
        %v266 = vld [vmem:[%s217 + $0x30] sm:$0xff]
        %v267 = vld [vmem:[%s217 + $0x38] sm:$0xff]
        %v268 = vld [vmem:[%s217 + $0x40] sm:$0xff]
        %v269 = vld [vmem:[%s217 + $0x48] sm:$0xff]
        %v270 = vld [vmem:[%s217 + $0x50] sm:$0xff]
        %v271 = vld [vmem:[%s217 + $0x58] sm:$0xff]
        %v272 = vld [vmem:[%s217 + $0x60] sm:$0xff]
        %v273 = vld [vmem:[%s217 + $0x68] sm:$0xff]
        %v274 = vld [vmem:[%s217 + $0x70] sm:$0xff]
        %v275 = vld [vmem:[%s217 + $0x78] sm:$0xff]
        %v276 = vld [vmem:[%s226] sm:$0xff]
        %v277 = vld [vmem:[%s226 + $0x8] sm:$0xff]
        %v278 = vld [vmem:[%s226 + $0x10] sm:$0xff]
        %v279 = vld [vmem:[%s226 + $0x18] sm:$0xff]
        %v280 = vld [vmem:[%s226 + $0x20] sm:$0xff]
        %v281 = vld [vmem:[%s226 + $0x28] sm:$0xff]
        %v282 = vld [vmem:[%s226 + $0x30] sm:$0xff]
        %v283 = vld [vmem:[%s226 + $0x38] sm:$0xff]
        %v284 = vld [vmem:[%s226 + $0x40] sm:$0xff]
        %v285 = vld [vmem:[%s226 + $0x48] sm:$0xff]
        %v286 = vld [vmem:[%s226 + $0x50] sm:$0xff]
        %v287 = vld [vmem:[%s226 + $0x58] sm:$0xff]
        %v288 = vld [vmem:[%s226 + $0x60] sm:$0xff]
        %v289 = vld [vmem:[%s226 + $0x68] sm:$0xff]
        %v290 = vld [vmem:[%s226 + $0x70] sm:$0xff]
        %v291 = vld [vmem:[%s226 + $0x78] sm:$0xff]
        %v292 = vpack.c.bf16 %v261, %v260
        %v293 = vpack.c.bf16 %v277, %v276
        %v294 = vpack.c.bf16 %v263, %v262
        %v295 = vpack.c.bf16 %v279, %v278
        %v296 = vpack.c.bf16 %v265, %v264
        %v297 = vpack.c.bf16 %v281, %v280
        %v298 = vpack.c.bf16 %v267, %v266
        %v299 = vpack.c.bf16 %v283, %v282
        %v300 = vpack.c.bf16 %v269, %v268
        %v301 = vpack.c.bf16 %v285, %v284
        %v302 = vpack.c.bf16 %v271, %v270
        %v303 = vpack.c.bf16 %v287, %v286
        %v304 = vpack.c.bf16 %v273, %v272
        %v305 = vpack.c.bf16 %v289, %v288
        %v306 = vpack.c.bf16 %v275, %v274
        %v307 = vpack.c.bf16 %v291, %v290
        %v308 = vld [vmem:[%s2] sm:$0xff]
        %v309 = vld [vmem:[%s2 + $0x8] sm:$0xf]
        %v310 = vld [vmem:[%s2 + $0xc] sm:$0xff]
        %v311 = vld [vmem:[%s2 + $0x14] sm:$0xf]
        %v312 = vld [vmem:[%s2 + $0x18] sm:$0xff]
        %v313 = vld [vmem:[%s2 + $0x20] sm:$0xf]
        %v314 = vld [vmem:[%s2 + $0x24] sm:$0xff]
        %v315 = vld [vmem:[%s2 + $0x2c] sm:$0xf]
        %v316 = vld [vmem:[%s2 + $0x30] sm:$0xff]
        %v317 = vld [vmem:[%s2 + $0x38] sm:$0xf]
        %v318 = vld [vmem:[%s2 + $0x3c] sm:$0xff]
        %v319 = vld [vmem:[%s2 + $0x44] sm:$0xf]
        %v320 = vld [vmem:[%s2 + $0x48] sm:$0xff]
        %v321 = vld [vmem:[%s2 + $0x50] sm:$0xf]
        %v322 = vld [vmem:[%s2 + $0x54] sm:$0xff]
        %v323 = vld [vmem:[%s2 + $0x5c] sm:$0xf]
        %v324 = vld [vmem:[%s2 + $0x60] sm:$0xff]
        %v325 = vld [vmem:[%s2 + $0x68] sm:$0xf]
        %v326 = vld [vmem:[%s2 + $0x6c] sm:$0xff]
        %v327 = vld [vmem:[%s2 + $0x74] sm:$0xf]
        %v328 = vld [vmem:[%s2 + $0x78] sm:$0xff]
        %v329 = vld [vmem:[%s2 + $0x80] sm:$0xf]
        %v330 = vld [vmem:[%s2 + $0x84] sm:$0xff]
        %v331 = vld [vmem:[%s2 + $0x8c] sm:$0xf]
        %v332 = vld [vmem:[%s2 + $0x90] sm:$0xff]
        %v333 = vld [vmem:[%s2 + $0x98] sm:$0xf]
        %v334 = vld [vmem:[%s2 + $0x9c] sm:$0xff]
        %v335 = vld [vmem:[%s2 + $0xa4] sm:$0xf]
        %v336 = vld [vmem:[%s2 + $0xa8] sm:$0xff]
        %v337 = vld [vmem:[%s2 + $0xb0] sm:$0xf]
        %v338 = vld [vmem:[%s2 + $0xb4] sm:$0xff]
        %v339 = vld [vmem:[%s2 + $0xbc] sm:$0xf]
        %v340 = vld [vmem:[%s2 + $0xc0] sm:$0xff]
        %v341 = vld [vmem:[%s2 + $0xc8] sm:$0xf]
        %v342 = vld [vmem:[%s2 + $0xcc] sm:$0xff]
        %v343 = vld [vmem:[%s2 + $0xd4] sm:$0xf]
        %v344 = vld [vmem:[%s2 + $0xd8] sm:$0xff]
        %v345 = vld [vmem:[%s2 + $0xe0] sm:$0xf]
        %v346 = vld [vmem:[%s2 + $0xe4] sm:$0xff]
        %v347 = vld [vmem:[%s2 + $0xec] sm:$0xf]
        %v348 = vld [vmem:[%s2 + $0xf0] sm:$0xff]
        %v349 = vld [vmem:[%s2 + $0xf8] sm:$0xf]
        %v350 = vld [vmem:[%s2 + $0xfc] sm:$0xff]
        %v351 = vld [vmem:[%s2 + $0x104] sm:$0xf]
        %v352 = vld [vmem:[%s2 + $0x108] sm:$0xff]
        %v353 = vld [vmem:[%s2 + $0x110] sm:$0xf]
        %v354 = vld [vmem:[%s2 + $0x114] sm:$0xff]
        %v355 = vld [vmem:[%s2 + $0x11c] sm:$0xf]
        %v356 = vld [vmem:[%s2 + $0x120] sm:$0xff]
        %v357 = vld [vmem:[%s2 + $0x128] sm:$0xf]
        %v358 = vld [vmem:[%s2 + $0x12c] sm:$0xff]
        %v359 = vld [vmem:[%s2 + $0x134] sm:$0xf]
        %v360 = vld [vmem:[%s2 + $0x138] sm:$0xff]
        %v361 = vld [vmem:[%s2 + $0x140] sm:$0xf]
        %v362 = vld [vmem:[%s2 + $0x144] sm:$0xff]
        %v363 = vld [vmem:[%s2 + $0x14c] sm:$0xf]
        %v364 = vld [vmem:[%s2 + $0x150] sm:$0xff]
        %v365 = vld [vmem:[%s2 + $0x158] sm:$0xf]
        %v366 = vld [vmem:[%s2 + $0x15c] sm:$0xff]
        %v367 = vld [vmem:[%s2 + $0x164] sm:$0xf]
        %v368 = vld [vmem:[%s2 + $0x168] sm:$0xff]
        %v369 = vld [vmem:[%s2 + $0x170] sm:$0xf]
        %v370 = vld [vmem:[%s2 + $0x174] sm:$0xff]
        %v371 = vld [vmem:[%s2 + $0x17c] sm:$0xf]
        %v372 = vld [vmem:[%s3] sm:$0x7]
        %v374 = vlaneseq
        %v375 = vshrl.u32 %v374, 7
        %v376 = vsub.s32 0, %v375
        %v377 = vrot.slane %v372, %v376
        %v378 = vlaneseq
        %v379 = vshrl.u32 %v378, 7
        %v380 = vsub.s32 1, %v379
        %v381 = vrot.slane %v372, %v380
        %v382 = vlaneseq
        %v383 = vshrl.u32 %v382, 7
        %v384 = vsub.s32 2, %v383
        %v385 = vrot.slane %v372, %v384
        %v453 = vunpack.c.l.b16 %v308
        %v454 = vunpack.c.h.b16 %v308
        %v455 = vunpack.c.l.b16 %v309
        %v456 = vunpack.c.l.b16 %v310
        %v457 = vunpack.c.h.b16 %v310
        %v458 = vunpack.c.l.b16 %v311
        %v459 = vunpack.c.l.b16 %v312
        %v460 = vunpack.c.h.b16 %v312
        %v461 = vunpack.c.l.b16 %v313
        %v462 = vunpack.c.l.b16 %v314
        %v463 = vunpack.c.h.b16 %v314
        %v464 = vunpack.c.l.b16 %v315
        %v465 = vunpack.c.l.b16 %v316
        %v466 = vunpack.c.h.b16 %v316
        %v467 = vunpack.c.l.b16 %v317
        %v468 = vunpack.c.l.b16 %v318
        %v469 = vunpack.c.h.b16 %v318
        %v470 = vunpack.c.l.b16 %v319
        %v471 = vunpack.c.l.b16 %v320
        %v472 = vunpack.c.h.b16 %v320
        %v473 = vunpack.c.l.b16 %v321
        %v474 = vunpack.c.l.b16 %v322
        %v475 = vunpack.c.h.b16 %v322
        %v476 = vunpack.c.l.b16 %v323
        %v477 = vunpack.c.l.b16 %v324
        %v478 = vunpack.c.h.b16 %v324
        %v479 = vunpack.c.l.b16 %v325
        %v480 = vunpack.c.l.b16 %v326
        %v481 = vunpack.c.h.b16 %v326
        %v482 = vunpack.c.l.b16 %v327
        %v483 = vunpack.c.l.b16 %v328
        %v484 = vunpack.c.h.b16 %v328
        %v485 = vunpack.c.l.b16 %v329
        %v486 = vunpack.c.l.b16 %v330
        %v487 = vunpack.c.h.b16 %v330
        %v488 = vunpack.c.l.b16 %v331
        %v489 = vunpack.c.l.b16 %v332
        %v490 = vunpack.c.h.b16 %v332
        %v491 = vunpack.c.l.b16 %v333
        %v492 = vunpack.c.l.b16 %v334
        %v493 = vunpack.c.h.b16 %v334
        %v494 = vunpack.c.l.b16 %v335
        %v495 = vunpack.c.l.b16 %v336
        %v496 = vunpack.c.h.b16 %v336
        %v497 = vunpack.c.l.b16 %v337
        %v498 = vunpack.c.l.b16 %v338
        %v499 = vunpack.c.h.b16 %v338
        %v500 = vunpack.c.l.b16 %v339
        %v501 = vunpack.c.l.b16 %v340
        %v502 = vunpack.c.h.b16 %v340
        %v503 = vunpack.c.l.b16 %v341
        %v504 = vunpack.c.l.b16 %v342
        %v505 = vunpack.c.h.b16 %v342
        %v506 = vunpack.c.l.b16 %v343
        %v507 = vunpack.c.l.b16 %v344
        %v508 = vunpack.c.h.b16 %v344
        %v509 = vunpack.c.l.b16 %v345
        %v510 = vunpack.c.l.b16 %v346
        %v511 = vunpack.c.h.b16 %v346
        %v512 = vunpack.c.l.b16 %v347
        %v513 = vunpack.c.l.b16 %v348
        %v514 = vunpack.c.h.b16 %v348
        %v515 = vunpack.c.l.b16 %v349
        %v516 = vunpack.c.l.b16 %v350
        %v517 = vunpack.c.h.b16 %v350
        %v518 = vunpack.c.l.b16 %v351
        %v519 = vunpack.c.l.b16 %v352
        %v520 = vunpack.c.h.b16 %v352
        %v521 = vunpack.c.l.b16 %v353
        %v522 = vunpack.c.l.b16 %v354
        %v523 = vunpack.c.h.b16 %v354
        %v524 = vunpack.c.l.b16 %v355
        %v525 = vunpack.c.l.b16 %v356
        %v526 = vunpack.c.h.b16 %v356
        %v527 = vunpack.c.l.b16 %v357
        %v528 = vunpack.c.l.b16 %v358
        %v529 = vunpack.c.h.b16 %v358
        %v530 = vunpack.c.l.b16 %v359
        %v531 = vunpack.c.l.b16 %v360
        %v532 = vunpack.c.h.b16 %v360
        %v533 = vunpack.c.l.b16 %v361
        %v534 = vunpack.c.l.b16 %v362
        %v535 = vunpack.c.h.b16 %v362
        %v536 = vunpack.c.l.b16 %v363
        %v537 = vunpack.c.l.b16 %v364
        %v538 = vunpack.c.h.b16 %v364
        %v539 = vunpack.c.l.b16 %v365
        %v540 = vunpack.c.l.b16 %v366
        %v541 = vunpack.c.h.b16 %v366
        %v542 = vunpack.c.l.b16 %v367
        %v543 = vunpack.c.l.b16 %v368
        %v544 = vunpack.c.h.b16 %v368
        %v545 = vunpack.c.l.b16 %v369
        %v546 = vunpack.c.l.b16 %v370
        %v547 = vunpack.c.h.b16 %v370
        %v548 = vunpack.c.l.b16 %v371
        %v549 = vpack.c.b16 %v456, %v453
        %v550 = vpack.c.b16 %v457, %v454
        %v551 = vpack.c.b16 %v458, %v455
        %v552 = vpack.c.b16 %v462, %v459
        %v553 = vpack.c.b16 %v463, %v460
        %v554 = vpack.c.b16 %v464, %v461
        %v555 = vpack.c.b16 %v468, %v465
        %v556 = vpack.c.b16 %v469, %v466
        %v557 = vpack.c.b16 %v470, %v467
        %v558 = vpack.c.b16 %v474, %v471
        %v559 = vpack.c.b16 %v475, %v472
        %v560 = vpack.c.b16 %v476, %v473
        %v561 = vpack.c.b16 %v480, %v477
        %v562 = vpack.c.b16 %v481, %v478
        %v563 = vpack.c.b16 %v482, %v479
        %v564 = vpack.c.b16 %v486, %v483
        %v565 = vpack.c.b16 %v487, %v484
        %v566 = vpack.c.b16 %v488, %v485
        %v567 = vpack.c.b16 %v492, %v489
        %v568 = vpack.c.b16 %v493, %v490
        %v569 = vpack.c.b16 %v494, %v491
        %v570 = vpack.c.b16 %v498, %v495
        %v571 = vpack.c.b16 %v499, %v496
        %v572 = vpack.c.b16 %v500, %v497
        %v573 = vpack.c.b16 %v504, %v501
        %v574 = vpack.c.b16 %v505, %v502
        %v575 = vpack.c.b16 %v506, %v503
        %v576 = vpack.c.b16 %v510, %v507
        %v577 = vpack.c.b16 %v511, %v508
        %v578 = vpack.c.b16 %v512, %v509
        %v579 = vpack.c.b16 %v516, %v513
        %v580 = vpack.c.b16 %v517, %v514
        %v581 = vpack.c.b16 %v518, %v515
        %v582 = vpack.c.b16 %v522, %v519
        %v583 = vpack.c.b16 %v523, %v520
        %v584 = vpack.c.b16 %v524, %v521
        %v585 = vpack.c.b16 %v528, %v525
        %v586 = vpack.c.b16 %v529, %v526
        %v587 = vpack.c.b16 %v530, %v527
        %v588 = vpack.c.b16 %v534, %v531
        %v589 = vpack.c.b16 %v535, %v532
        %v590 = vpack.c.b16 %v536, %v533
        %v591 = vpack.c.b16 %v540, %v537
        %v592 = vpack.c.b16 %v541, %v538
        %v593 = vpack.c.b16 %v542, %v539
        %v594 = vpack.c.b16 %v546, %v543
        %v595 = vpack.c.b16 %v547, %v544
        %v596 = vpack.c.b16 %v548, %v545
        %645 = vmatprep.subr.bf16.mxu0 %v550
        %646 = vmatpush1.bf16.msra.mxu0 %v549
        %647 = vmatprep.subr.bf16.mxu0 %v553
        %648 = vmatpush1.bf16.msra.mxu0 %v552
        %649 = vmatprep.subr.bf16.mxu0 %v556
        %650 = vmatpush1.bf16.msra.mxu0 %v555
        %651 = vmatprep.subr.bf16.mxu0 %v559
        %652 = vmatpush1.bf16.msra.mxu0 %v558
        %653 = vmatprep.subr.bf16.mxu0 %v562
        %654 = vmatpush1.bf16.msra.mxu0 %v561
        %655 = vmatprep.subr.bf16.mxu0 %v565
        %656 = vmatpush1.bf16.msra.mxu0 %v564
        %657 = vmatprep.subr.bf16.mxu0 %v568
        %658 = vmatpush1.bf16.msra.mxu0 %v567
        %659 = vmatprep.subr.bf16.mxu0 %v571
        %660 = vmatpush1.bf16.msra.mxu0 %v570
        %661 = vmatprep.subr.bf16.mxu0 %v574
        %662 = vmatpush1.bf16.msra.mxu0 %v573
        %663 = vmatprep.subr.bf16.mxu0 %v577
        %664 = vmatpush1.bf16.msra.mxu0 %v576
        %665 = vmatprep.subr.bf16.mxu0 %v580
        %666 = vmatpush1.bf16.msra.mxu0 %v579
        %667 = vmatprep.subr.bf16.mxu0 %v583
        %668 = vmatpush1.bf16.msra.mxu0 %v582
        %669 = vmatprep.subr.bf16.mxu0 %v586
        %670 = vmatpush1.bf16.msra.mxu0 %v585
        %671 = vmatprep.subr.bf16.mxu0 %v589
        %672 = vmatpush1.bf16.msra.mxu0 %v588
        %673 = vmatprep.subr.bf16.mxu0 %v592
        %674 = vmatpush1.bf16.msra.mxu0 %v591
        %675 = vmatprep.subr.bf16.mxu0 %v595
        %676 = vmatpush1.bf16.msra.mxu0 %v594
        %677 = vmatprep.mubr.bf16.mxu0 %v293
        %678 = vmatmul.mubr.bf16.gmra.mrb[0].mxu0 %v292
        %v679 = vpop.f32.mrb[0].mxu0
        %v680 = vadd.f32 %v377, %v679
        %v681 = vpop.f32.mrb[0].mxu0
        %v682 = vadd.f32 %v381, %v681
        %v683 = vpop.f32.mrb[0].mxu0
        %v684 = vadd.f32 %v377, %v683
        %v685 = vpop.f32.mrb[0].mxu0
        %v686 = vadd.f32 %v381, %v685
        %687 = vmatprep.mubr.bf16.mxu0 %v295
        %688 = vmatmul.mubr.bf16.gmra.mrb[0].mxu0 %v294
        %v689 = vpop.f32.mrb[0].mxu0
        %v690 = vadd.f32 %v377, %v689
        %v691 = vpop.f32.mrb[0].mxu0
        %v692 = vadd.f32 %v381, %v691
        %v693 = vpop.f32.mrb[0].mxu0
        %v694 = vadd.f32 %v377, %v693
        %v695 = vpop.f32.mrb[0].mxu0
        %v696 = vadd.f32 %v381, %v695
        %697 = vmatprep.mubr.bf16.mxu0 %v297
        %698 = vmatmul.mubr.bf16.gmra.mrb[0].mxu0 %v296
        %v699 = vpop.f32.mrb[0].mxu0
        %v700 = vadd.f32 %v377, %v699
        %v701 = vpop.f32.mrb[0].mxu0
        %v702 = vadd.f32 %v381, %v701
        %v703 = vpop.f32.mrb[0].mxu0
        %v704 = vadd.f32 %v377, %v703
        %v705 = vpop.f32.mrb[0].mxu0
        %v706 = vadd.f32 %v381, %v705
        %707 = vmatprep.mubr.bf16.mxu0 %v299
        %708 = vmatmul.mubr.bf16.gmra.mrb[0].mxu0 %v298
        %v709 = vpop.f32.mrb[0].mxu0
        %v710 = vadd.f32 %v377, %v709
        %v711 = vpop.f32.mrb[0].mxu0
        %v712 = vadd.f32 %v381, %v711
        %v713 = vpop.f32.mrb[0].mxu0
        %v714 = vadd.f32 %v377, %v713
        %v715 = vpop.f32.mrb[0].mxu0
        %v716 = vadd.f32 %v381, %v715
        %717 = vmatprep.mubr.bf16.mxu0 %v301
        %718 = vmatmul.mubr.bf16.gmra.mrb[0].mxu0 %v300
        %v719 = vpop.f32.mrb[0].mxu0
        %v720 = vadd.f32 %v377, %v719
        %v721 = vpop.f32.mrb[0].mxu0
        %v722 = vadd.f32 %v381, %v721
        %v723 = vpop.f32.mrb[0].mxu0
        %v724 = vadd.f32 %v377, %v723
        %v725 = vpop.f32.mrb[0].mxu0
        %v726 = vadd.f32 %v381, %v725
        %727 = vmatprep.mubr.bf16.mxu0 %v303
        %728 = vmatmul.mubr.bf16.gmra.mrb[0].mxu0 %v302
        %v729 = vpop.f32.mrb[0].mxu0
        %v730 = vadd.f32 %v377, %v729
        %v731 = vpop.f32.mrb[0].mxu0
        %v732 = vadd.f32 %v381, %v731
        %v733 = vpop.f32.mrb[0].mxu0
        %v734 = vadd.f32 %v377, %v733
        %v735 = vpop.f32.mrb[0].mxu0
        %v736 = vadd.f32 %v381, %v735
        %737 = vmatprep.mubr.bf16.mxu0 %v305
        %738 = vmatmul.mubr.bf16.gmra.mrb[0].mxu0 %v304
        %v739 = vpop.f32.mrb[0].mxu0
        %v740 = vadd.f32 %v377, %v739
        %v741 = vpop.f32.mrb[0].mxu0
        %v742 = vadd.f32 %v381, %v741
        %v743 = vpop.f32.mrb[0].mxu0
        %v744 = vadd.f32 %v377, %v743
        %v745 = vpop.f32.mrb[0].mxu0
        %v746 = vadd.f32 %v381, %v745
        %747 = vmatprep.mubr.bf16.mxu0 %v307
        %748 = vmatmul.mubr.bf16.gmra.mrb[0].mxu0 %v306
        %v749 = vpop.f32.mrb[0].mxu0
        %v750 = vadd.f32 %v377, %v749
        %v751 = vpop.f32.mrb[0].mxu0
        %v752 = vadd.f32 %v381, %v751
        %v753 = vpop.f32.mrb[0].mxu0
        %v754 = vadd.f32 %v377, %v753
        %v755 = vpop.f32.mrb[0].mxu0
        %v756 = vadd.f32 %v381, %v755
        %757 = vdwg.mxu0
        %758 = vmatprep.subr.bf16.mxu0 0
        %759 = vmatpush1.bf16.msra.mxu0 %v551
        %760 = vmatprep.subr.bf16.mxu0 0
        %761 = vmatpush1.bf16.msra.mxu0 %v554
        %762 = vmatprep.subr.bf16.mxu0 0
        %763 = vmatpush1.bf16.msra.mxu0 %v557
        %764 = vmatprep.subr.bf16.mxu0 0
        %765 = vmatpush1.bf16.msra.mxu0 %v560
        %766 = vmatprep.subr.bf16.mxu0 0
        %767 = vmatpush1.bf16.msra.mxu0 %v563
        %768 = vmatprep.subr.bf16.mxu0 0
        %769 = vmatpush1.bf16.msra.mxu0 %v566
        %770 = vmatprep.subr.bf16.mxu0 0
        %771 = vmatpush1.bf16.msra.mxu0 %v569
        %772 = vmatprep.subr.bf16.mxu0 0
        %773 = vmatpush1.bf16.msra.mxu0 %v572
        %774 = vmatprep.subr.bf16.mxu0 0
        %775 = vmatpush1.bf16.msra.mxu0 %v575
        %776 = vmatprep.subr.bf16.mxu0 0
        %777 = vmatpush1.bf16.msra.mxu0 %v578
        %778 = vmatprep.subr.bf16.mxu0 0
        %779 = vmatpush1.bf16.msra.mxu0 %v581
        %780 = vmatprep.subr.bf16.mxu0 0
        %781 = vmatpush1.bf16.msra.mxu0 %v584
        %782 = vmatprep.subr.bf16.mxu0 0
        %783 = vmatpush1.bf16.msra.mxu0 %v587
        %784 = vmatprep.subr.bf16.mxu0 0
        %785 = vmatpush1.bf16.msra.mxu0 %v590
        %786 = vmatprep.subr.bf16.mxu0 0
        %787 = vmatpush1.bf16.msra.mxu0 %v593
        %788 = vmatprep.subr.bf16.mxu0 0
        %789 = vmatpush1.bf16.msra.mxu0 %v596
        %790 = vmatprep.mubr.bf16.mxu0 %v293
        %791 = vmatmul.mubr.bf16.gmra.mrb[0].mxu0 %v292
        %v792 = vpop.f32.mrb[0].mxu0
        %v793 = vadd.f32 %v385, %v792
        %v794 = vpop.f32.mrb[0].mxu0
        %v795 = vpop.f32.mrb[0].mxu0
        %v796 = vadd.f32 %v385, %v795
        %v797 = vpop.f32.mrb[0].mxu0
        %798 = vmatprep.mubr.bf16.mxu0 %v295
        %799 = vmatmul.mubr.bf16.gmra.mrb[0].mxu0 %v294
        %v800 = vpop.f32.mrb[0].mxu0
        %v801 = vadd.f32 %v385, %v800
        %v802 = vpop.f32.mrb[0].mxu0
        %v803 = vpop.f32.mrb[0].mxu0
        %v804 = vadd.f32 %v385, %v803
        %v805 = vpop.f32.mrb[0].mxu0
        %806 = vmatprep.mubr.bf16.mxu0 %v297
        %807 = vmatmul.mubr.bf16.gmra.mrb[0].mxu0 %v296
        %v808 = vpop.f32.mrb[0].mxu0
        %v809 = vadd.f32 %v385, %v808
        %v810 = vpop.f32.mrb[0].mxu0
        %v811 = vpop.f32.mrb[0].mxu0
        %v812 = vadd.f32 %v385, %v811
        %v813 = vpop.f32.mrb[0].mxu0
        %814 = vmatprep.mubr.bf16.mxu0 %v299
        %815 = vmatmul.mubr.bf16.gmra.mrb[0].mxu0 %v298
        %v816 = vpop.f32.mrb[0].mxu0
        %v817 = vadd.f32 %v385, %v816
        %v818 = vpop.f32.mrb[0].mxu0
        %v819 = vpop.f32.mrb[0].mxu0
        %v820 = vadd.f32 %v385, %v819
        %v821 = vpop.f32.mrb[0].mxu0
        %822 = vmatprep.mubr.bf16.mxu0 %v301
        %823 = vmatmul.mubr.bf16.gmra.mrb[0].mxu0 %v300
        %v824 = vpop.f32.mrb[0].mxu0
        %v825 = vadd.f32 %v385, %v824
        %v826 = vpop.f32.mrb[0].mxu0
        %v827 = vpop.f32.mrb[0].mxu0
        %v828 = vadd.f32 %v385, %v827
        %v829 = vpop.f32.mrb[0].mxu0
        %830 = vmatprep.mubr.bf16.mxu0 %v303
        %831 = vmatmul.mubr.bf16.gmra.mrb[0].mxu0 %v302
        %v832 = vpop.f32.mrb[0].mxu0
        %v833 = vadd.f32 %v385, %v832
        %v834 = vpop.f32.mrb[0].mxu0
        %v835 = vpop.f32.mrb[0].mxu0
        %v836 = vadd.f32 %v385, %v835
        %v837 = vpop.f32.mrb[0].mxu0
        %838 = vmatprep.mubr.bf16.mxu0 %v305
        %839 = vmatmul.mubr.bf16.gmra.mrb[0].mxu0 %v304
        %v840 = vpop.f32.mrb[0].mxu0
        %v841 = vadd.f32 %v385, %v840
        %v842 = vpop.f32.mrb[0].mxu0
        %v843 = vpop.f32.mrb[0].mxu0
        %v844 = vadd.f32 %v385, %v843
        %v845 = vpop.f32.mrb[0].mxu0
        %846 = vmatprep.mubr.bf16.mxu0 %v307
        %847 = vmatmul.mubr.bf16.gmra.mrb[0].mxu0 %v306
        %v848 = vpop.f32.mrb[0].mxu0
        %v849 = vadd.f32 %v385, %v848
        %v850 = vpop.f32.mrb[0].mxu0
        %v851 = vpop.f32.mrb[0].mxu0
        %v852 = vadd.f32 %v385, %v851
        %v853 = vpop.f32.mrb[0].mxu0
        %854 = vdwg.mxu0
        %v855 = vxor.u32 %v680, 2147483648
        %v856 = vxor.u32 %v684, 2147483648
        %v857 = vxor.u32 %v690, 2147483648
        %v858 = vxor.u32 %v694, 2147483648
        %v859 = vxor.u32 %v700, 2147483648
        %v860 = vxor.u32 %v704, 2147483648
        %v861 = vxor.u32 %v710, 2147483648
        %v862 = vxor.u32 %v714, 2147483648
        %v863 = vxor.u32 %v720, 2147483648
        %v864 = vxor.u32 %v724, 2147483648
        %v865 = vxor.u32 %v730, 2147483648
        %v866 = vxor.u32 %v734, 2147483648
        %v867 = vxor.u32 %v740, 2147483648
        %v868 = vxor.u32 %v744, 2147483648
        %v869 = vxor.u32 %v750, 2147483648
        %v870 = vxor.u32 %v754, 2147483648
        %v871 = vmul.f32 %v855, 1.442695
        %v872 = vpow.pop %v871
        %v873 = vmul.f32 %v856, 1.442695
        %v874 = vpow.pop %v873
        %v875 = vmul.f32 %v857, 1.442695
        %v876 = vpow.pop %v875
        %v877 = vmul.f32 %v858, 1.442695
        %v878 = vpow.pop %v877
        %v879 = vmul.f32 %v859, 1.442695
        %v880 = vpow.pop %v879
        %v881 = vmul.f32 %v860, 1.442695
        %v882 = vpow.pop %v881
        %v883 = vmul.f32 %v861, 1.442695
        %v884 = vpow.pop %v883
        %v885 = vmul.f32 %v862, 1.442695
        %v886 = vpow.pop %v885
        %v887 = vmul.f32 %v863, 1.442695
        %v888 = vpow.pop %v887
        %v889 = vmul.f32 %v864, 1.442695
        %v890 = vpow.pop %v889
        %v891 = vmul.f32 %v865, 1.442695
        %v892 = vpow.pop %v891
        %v893 = vmul.f32 %v866, 1.442695
        %v894 = vpow.pop %v893
        %v895 = vmul.f32 %v867, 1.442695
        %v896 = vpow.pop %v895
        %v897 = vmul.f32 %v868, 1.442695
        %v898 = vpow.pop %v897
        %v899 = vmul.f32 %v869, 1.442695
        %v900 = vpow.pop %v899
        %v901 = vmul.f32 %v870, 1.442695
        %v902 = vpow.pop %v901
        %v903 = vadd.f32 %v872, 1.0
        %v904 = vadd.f32 %v874, 1.0
        %v905 = vadd.f32 %v876, 1.0
        %v906 = vadd.f32 %v878, 1.0
        %v907 = vadd.f32 %v880, 1.0
        %v908 = vadd.f32 %v882, 1.0
        %v909 = vadd.f32 %v884, 1.0
        %v910 = vadd.f32 %v886, 1.0
        %v911 = vadd.f32 %v888, 1.0
        %v912 = vadd.f32 %v890, 1.0
        %v913 = vadd.f32 %v892, 1.0
        %v914 = vadd.f32 %v894, 1.0
        %v915 = vadd.f32 %v896, 1.0
        %v916 = vadd.f32 %v898, 1.0
        %v917 = vadd.f32 %v900, 1.0
        %v918 = vadd.f32 %v902, 1.0
        %v919 = vrcp.pop %v903
        %v920 = vmul.f32 1.0, %v919
        %v921 = vrcp.pop %v904
        %v922 = vmul.f32 1.0, %v921
        %v923 = vrcp.pop %v905
        %v924 = vmul.f32 1.0, %v923
        %v925 = vrcp.pop %v906
        %v926 = vmul.f32 1.0, %v925
        %v927 = vrcp.pop %v907
        %v928 = vmul.f32 1.0, %v927
        %v929 = vrcp.pop %v908
        %v930 = vmul.f32 1.0, %v929
        %v931 = vrcp.pop %v909
        %v932 = vmul.f32 1.0, %v931
        %v933 = vrcp.pop %v910
        %v934 = vmul.f32 1.0, %v933
        %v935 = vrcp.pop %v911
        %v936 = vmul.f32 1.0, %v935
        %v937 = vrcp.pop %v912
        %v938 = vmul.f32 1.0, %v937
        %v939 = vrcp.pop %v913
        %v940 = vmul.f32 1.0, %v939
        %v941 = vrcp.pop %v914
        %v942 = vmul.f32 1.0, %v941
        %v943 = vrcp.pop %v915
        %v944 = vmul.f32 1.0, %v943
        %v945 = vrcp.pop %v916
        %v946 = vmul.f32 1.0, %v945
        %v947 = vrcp.pop %v917
        %v948 = vmul.f32 1.0, %v947
        %v949 = vrcp.pop %v918
        %v950 = vmul.f32 1.0, %v949
        %v951 = vtanh.pop %v682
        %v952 = vtanh.pop %v686
        %v953 = vtanh.pop %v692
        %v954 = vtanh.pop %v696
        %v955 = vtanh.pop %v702
        %v956 = vtanh.pop %v706
        %v957 = vtanh.pop %v712
        %v958 = vtanh.pop %v716
        %v959 = vtanh.pop %v722
        %v960 = vtanh.pop %v726
        %v961 = vtanh.pop %v732
        %v962 = vtanh.pop %v736
        %v963 = vtanh.pop %v742
        %v964 = vtanh.pop %v746
        %v965 = vtanh.pop %v752
        %v966 = vtanh.pop %v756
        %v967 = vxor.u32 %v793, 2147483648
        %v968 = vxor.u32 %v796, 2147483648
        %v969 = vxor.u32 %v801, 2147483648
        %v970 = vxor.u32 %v804, 2147483648
        %v971 = vxor.u32 %v809, 2147483648
        %v972 = vxor.u32 %v812, 2147483648
        %v973 = vxor.u32 %v817, 2147483648
        %v974 = vxor.u32 %v820, 2147483648
        %v975 = vxor.u32 %v825, 2147483648
        %v976 = vxor.u32 %v828, 2147483648
        %v977 = vxor.u32 %v833, 2147483648
        %v978 = vxor.u32 %v836, 2147483648
        %v979 = vxor.u32 %v841, 2147483648
        %v980 = vxor.u32 %v844, 2147483648
        %v981 = vxor.u32 %v849, 2147483648
        %v982 = vxor.u32 %v852, 2147483648
        %v983 = vmul.f32 %v967, 1.442695
        %v984 = vpow.pop %v983
        %v985 = vmul.f32 %v968, 1.442695
        %v986 = vpow.pop %v985
        %v987 = vmul.f32 %v969, 1.442695
        %v988 = vpow.pop %v987
        %v989 = vmul.f32 %v970, 1.442695
        %v990 = vpow.pop %v989
        %v991 = vmul.f32 %v971, 1.442695
        %v992 = vpow.pop %v991
        %v993 = vmul.f32 %v972, 1.442695
        %v994 = vpow.pop %v993
        %v995 = vmul.f32 %v973, 1.442695
        %v996 = vpow.pop %v995
        %v997 = vmul.f32 %v974, 1.442695
        %v998 = vpow.pop %v997
        %v999 = vmul.f32 %v975, 1.442695
        %v1000 = vpow.pop %v999
        %v1001 = vmul.f32 %v976, 1.442695
        %v1002 = vpow.pop %v1001
        %v1003 = vmul.f32 %v977, 1.442695
        %v1004 = vpow.pop %v1003
        %v1005 = vmul.f32 %v978, 1.442695
        %v1006 = vpow.pop %v1005
        %v1007 = vmul.f32 %v979, 1.442695
        %v1008 = vpow.pop %v1007
        %v1009 = vmul.f32 %v980, 1.442695
        %v1010 = vpow.pop %v1009
        %v1011 = vmul.f32 %v981, 1.442695
        %v1012 = vpow.pop %v1011
        %v1013 = vmul.f32 %v982, 1.442695
        %v1014 = vpow.pop %v1013
        %v1015 = vadd.f32 %v984, 1.0
        %v1016 = vadd.f32 %v986, 1.0
        %v1017 = vadd.f32 %v988, 1.0
        %v1018 = vadd.f32 %v990, 1.0
        %v1019 = vadd.f32 %v992, 1.0
        %v1020 = vadd.f32 %v994, 1.0
        %v1021 = vadd.f32 %v996, 1.0
        %v1022 = vadd.f32 %v998, 1.0
        %v1023 = vadd.f32 %v1000, 1.0
        %v1024 = vadd.f32 %v1002, 1.0
        %v1025 = vadd.f32 %v1004, 1.0
        %v1026 = vadd.f32 %v1006, 1.0
        %v1027 = vadd.f32 %v1008, 1.0
        %v1028 = vadd.f32 %v1010, 1.0
        %v1029 = vadd.f32 %v1012, 1.0
        %v1030 = vadd.f32 %v1014, 1.0
        %v1031 = vrcp.pop %v1015
        %v1032 = vmul.f32 1.0, %v1031
        %v1033 = vrcp.pop %v1016
        %v1034 = vmul.f32 1.0, %v1033
        %v1035 = vrcp.pop %v1017
        %v1036 = vmul.f32 1.0, %v1035
        %v1037 = vrcp.pop %v1018
        %v1038 = vmul.f32 1.0, %v1037
        %v1039 = vrcp.pop %v1019
        %v1040 = vmul.f32 1.0, %v1039
        %v1041 = vrcp.pop %v1020
        %v1042 = vmul.f32 1.0, %v1041
        %v1043 = vrcp.pop %v1021
        %v1044 = vmul.f32 1.0, %v1043
        %v1045 = vrcp.pop %v1022
        %v1046 = vmul.f32 1.0, %v1045
        %v1047 = vrcp.pop %v1023
        %v1048 = vmul.f32 1.0, %v1047
        %v1049 = vrcp.pop %v1024
        %v1050 = vmul.f32 1.0, %v1049
        %v1051 = vrcp.pop %v1025
        %v1052 = vmul.f32 1.0, %v1051
        %v1053 = vrcp.pop %v1026
        %v1054 = vmul.f32 1.0, %v1053
        %v1055 = vrcp.pop %v1027
        %v1056 = vmul.f32 1.0, %v1055
        %v1057 = vrcp.pop %v1028
        %v1058 = vmul.f32 1.0, %v1057
        %v1059 = vrcp.pop %v1029
        %v1060 = vmul.f32 1.0, %v1059
        %v1061 = vrcp.pop %v1030
        %v1062 = vmul.f32 1.0, %v1061
        %v1063 = vmul.f32 %v920, %v951
        %v1064 = vmul.f32 %v922, %v952
        %v1065 = vmul.f32 %v924, %v953
        %v1066 = vmul.f32 %v926, %v954
        %v1067 = vmul.f32 %v928, %v955
        %v1068 = vmul.f32 %v930, %v956
        %v1069 = vmul.f32 %v932, %v957
        %v1070 = vmul.f32 %v934, %v958
        %v1071 = vmul.f32 %v936, %v959
        %v1072 = vmul.f32 %v938, %v960
        %v1073 = vmul.f32 %v940, %v961
        %v1074 = vmul.f32 %v942, %v962
        %v1075 = vmul.f32 %v944, %v963
        %v1076 = vmul.f32 %v946, %v964
        %v1077 = vmul.f32 %v948, %v965
        %v1078 = vmul.f32 %v950, %v966
        %v1079 = vtanh.pop %v1063
        %v1080 = vtanh.pop %v1064
        %v1081 = vtanh.pop %v1065
        %v1082 = vtanh.pop %v1066
        %v1083 = vtanh.pop %v1067
        %v1084 = vtanh.pop %v1068
        %v1085 = vtanh.pop %v1069
        %v1086 = vtanh.pop %v1070
        %v1087 = vtanh.pop %v1071
        %v1088 = vtanh.pop %v1072
        %v1089 = vtanh.pop %v1073
        %v1090 = vtanh.pop %v1074
        %v1091 = vtanh.pop %v1075
        %v1092 = vtanh.pop %v1076
        %v1093 = vtanh.pop %v1077
        %v1094 = vtanh.pop %v1078
        %v1095 = vmul.f32 %v1032, %v1079
        %v1096 = vmul.f32 %v1034, %v1080
        %v1097 = vmul.f32 %v1036, %v1081
        %v1098 = vmul.f32 %v1038, %v1082
        %v1099 = vmul.f32 %v1040, %v1083
        %v1100 = vmul.f32 %v1042, %v1084
        %v1101 = vmul.f32 %v1044, %v1085
        %v1102 = vmul.f32 %v1046, %v1086
        %v1103 = vmul.f32 %v1048, %v1087
        %v1104 = vmul.f32 %v1050, %v1088
        %v1105 = vmul.f32 %v1052, %v1089
        %v1106 = vmul.f32 %v1054, %v1090
        %v1107 = vmul.f32 %v1056, %v1091
        %v1108 = vmul.f32 %v1058, %v1092
        %v1109 = vmul.f32 %v1060, %v1093
        %v1110 = vmul.f32 %v1062, %v1094
        %1111 = vst [vmem:[%s255] sm:$0xff] %v1095
        %1112 = vst [vmem:[%s255 + $0x8] sm:$0xff] %v1096
        %1113 = vst [vmem:[%s255 + $0x10] sm:$0xff] %v1097
        %1114 = vst [vmem:[%s255 + $0x18] sm:$0xff] %v1098
        %1115 = vst [vmem:[%s255 + $0x20] sm:$0xff] %v1099
        %1116 = vst [vmem:[%s255 + $0x28] sm:$0xff] %v1100
        %1117 = vst [vmem:[%s255 + $0x30] sm:$0xff] %v1101
        %1118 = vst [vmem:[%s255 + $0x38] sm:$0xff] %v1102
        %1119 = vst [vmem:[%s255 + $0x40] sm:$0xff] %v1103
        %1120 = vst [vmem:[%s255 + $0x48] sm:$0xff] %v1104
        %1121 = vst [vmem:[%s255 + $0x50] sm:$0xff] %v1105
        %1122 = vst [vmem:[%s255 + $0x58] sm:$0xff] %v1106
        %1123 = vst [vmem:[%s255 + $0x60] sm:$0xff] %v1107
        %1124 = vst [vmem:[%s255 + $0x68] sm:$0xff] %v1108
        %1125 = vst [vmem:[%s255 + $0x70] sm:$0xff] %v1109
        %1126 = vst [vmem:[%s255 + $0x78] sm:$0xff] %v1110
        %s1127 = sand.u32 %s126, 1
        %s1128 = scalar_lea.sflag [#allocation4], %s1127
        %s1129 = sand.u32 %s126, 1
        %s1130 = smul.addr %s1129, 128
        %s1131 = scalar_lea.vmem [#allocation7], %s1130
        // Predicated region
        $region45: #{lstm_module_step.1} parent=35 // pred_check
          %p1132 = pneg %p136
        $region46: #{lstm_module_step.1} parent=35 // pred_check_branch
          %1134 = sbr.rel (%p1132) target = $region48
        $region47: #{lstm_module_step.1} parent=35 // pred_region
          %s1135 = smul.u32 16, %s24
          %s1137 = ssub.s32 2048, 2048
          %1138 = vsyncadd %s1128, %s1137
          %s1139 = smul.addr %s1135, 128
          %s1140 = scalar_lea.hbm %s4, %s1139
          %s1141 = sshll.u32 %s1131, 4
          %s1142 = int_to_ptr.vmem [resolvable:$true] %s1141
          %1147 = dma.vmem_to_hbm [thread:$0]  %s1142, 2048, %s1140, %s1128, 128, 128, 8
        $region48: #{lstm_module_step.1} parent=35 // pred_fallthru
          _
      $region36: #{lstm_module_step.1} parent=5 // pred_fallthru
        _
      %p1148 = scmp.le.s32.totalorder 2, %s19
      // Predicated region
      $region49: #{lstm_module_step.1} parent=5 // pred_check
        %p1149 = pneg %p1148
      $region50: #{lstm_module_step.1} parent=5 // pred_check_branch
        %1151 = sbr.rel (%p1149) target = $region52
      $region51: #{lstm_module_step.1} parent=5 // pred_region
        %s1152 = ssub.s32 %s19, 2
        // Predicated region
        $region53: #{lstm_module_step.1} parent=51 // pred_check
          %p1153 = pneg %p142
        $region54: #{lstm_module_step.1} parent=51 // pred_check_branch
          %1155 = sbr.rel (%p1153) target = $region56
        $region55: #{lstm_module_step.1} parent=51 // pred_region
          %s1156 = sand.u32 %s127, 1
          %s1157 = scalar_lea.sflag [#allocation4], %s1156
          %s1158 = sand.u32 %s127, 1
          %s1159 = smul.addr %s1158, 128
          %s1160 = scalar_lea.vmem [#allocation7], %s1159
          %1161 = dma.done %s1157, 2048
        $region56: #{lstm_module_step.1} parent=51 // pred_fallthru
          _
      $region52: #{lstm_module_step.1} parent=5 // pred_fallthru
        _
    $region6: #{lstm_module_step.1} parent=1 // loop_footer
      %s23 = sadd.s32 1, %s19
    $region7: #{lstm_module_step.1} parent=1 // loop_footer_branch
      %18 = sbr.rel target = $region3
    $region8: #{lstm_module_step.1} parent=1 // loop_exit
      _
    %1162 = vsyncpa [#allocation3], 1
    %s1163 = scalar_lea.sflag [#allocation3], 1
    %1164 = vsyncpa %s1163, 1
    %1165 = vsyncpa [#allocation6], 1
    %s1166 = scalar_lea.sflag [#allocation6], 1
    %1167 = vsyncpa %s1166, 1
    %1168 = vsyncpa [#allocation4], 1
    %s1169 = scalar_lea.sflag [#allocation4], 1
    %1170 = vsyncpa %s1169, 1

</llo_original>
